<compile_context>
chip_gen: v7x
topology: tpu7x:2x2x1
jax: 0.10.0
libtpu: 0.0.40
codegen_flags: <defaults>
</compile_context>

<pallas_src>
import functools

import jax
import jax.numpy as jnp
from jax.experimental import pallas as pl
from jax.experimental.pallas import tpu as pltpu

LOG_SIG_MAX = 2.0
LOG_SIG_MIN = -20.0

_HEAD_ALIGN = 64   # per-head lane padding; 2 heads -> slab multiple of 128


def _round_up(x, m):
    return (x + m - 1) // m * m


# ---------------------------------------------------------------------------
# Kernel
# ---------------------------------------------------------------------------
def encoder_kernel(xs_ref, xa_ref, xn_ref,
                   w1_ref, b1_ref, w2_ref, b2_ref, wh_ref, bh_ref,
                   out_ref, xcat_ref, *, ds, da, fp):
    bf16 = jnp.bfloat16

    # Build concat([s, a, s']) in a small VMEM scratch (cheap lane copies);
    # the bf16 cast happens here so the wrapper feeds raw f32 activations.
    xcat_ref[:, :ds] = xs_ref[...].astype(bf16)
    xcat_ref[:, ds:ds + da] = xa_ref[...].astype(bf16)
    xcat_ref[:, ds + da:] = xn_ref[...].astype(bf16)

    # Layer 1: a single fused matmul over the whole concat K, f32 accumulate.
    z = jnp.dot(xcat_ref[...], w1_ref[...], preferred_element_type=jnp.float32)
    z = jnp.maximum(z + b1_ref[...], 0.0).astype(bf16)

    # Layer 2.
    z = jnp.dot(z, w2_ref[...], preferred_element_type=jnp.float32) + b2_ref[...]
    z = jnp.maximum(z, 0.0).astype(bf16)

    # Fused (mean | log_std) head: one matmul, clamp only the log_std lanes
    # via a lane mask, then a single dense full-width bf16 store.
    h = jnp.dot(z, wh_ref[...], preferred_element_type=jnp.float32) + bh_ref[...]
    lane = jax.lax.broadcasted_iota(jnp.int32, h.shape, 1)
    h = jnp.where(lane >= fp, jnp.clip(h, LOG_SIG_MIN, LOG_SIG_MAX), h)
    out_ref[...] = h.astype(out_ref.dtype)


# ---------------------------------------------------------------------------
# Wrapper
# ---------------------------------------------------------------------------
def encoder_forward(state, action, next_state, eparams, *, feature_dim, tb=512):
    """Pallas forward reproducing Encoder.forward. `eparams` comes from
    prepare_encoder_params; `feature_dim` and `tb` must be static."""
    B, Ds = state.shape
    Da = action.shape[1]
    K = 2 * Ds + Da
    H = eparams["w2"].shape[0]
    Fp2 = eparams["w_head"].shape[1]       # 2 * Fp (multiple of 128)
    Fp = Fp2 // 2

    # --- batch tiling -------------------------------------------------------
    MIN_TILE = 16  # multiple of both f32 (8) and bf16 (16) sublane tiles
    tb = max(MIN_TILE, (tb // MIN_TILE) * MIN_TILE)

    if B <= tb and B < 128:
        # Single full-extent tile: no divisibility requirement, no padding.
        TB, B_pad = B, B
    else:
        TB = min(tb, _round_up(B, MIN_TILE))
        # Guarantee >=2 grid steps so ("parallel",) can shard the batch
        # across both v7x TensorCores (harmless on v5e/v6e).
        TB = max(MIN_TILE, min(TB, _round_up(pl.cdiv(B, 2), MIN_TILE)))
        B_pad = _round_up(B, TB)

    if B_pad != B:
        pad = ((0, B_pad - B), (0, 0))
        state = jnp.pad(state, pad)
        action = jnp.pad(action, pad)
        next_state = jnp.pad(next_state, pad)

    # --- VMEM budget (actual footprint + headroom, not a blanket 32 MiB) ----
    w_bytes = (K * H + H * H + H * Fp2) * 2 + (H + H + Fp2) * 4
    tile_bytes = (2 * Ds + Da) * TB * 4      # f32 activation inputs
    tile_bytes += TB * Fp2 * 2               # bf16 output slab
    tile_bytes += TB * K * 2                 # x_cat scratch
    vmem_bytes = int(min(64 * 1024 * 1024,
                         max(4 * 1024 * 1024, 4 * (w_bytes + 2 * tile_bytes))))

    row_spec = lambda d: pl.BlockSpec((TB, d), lambda i: (i, 0))
    # Constant index_map: weights/biases stay resident in VMEM (one DMA).
    const_spec = lambda shape: pl.BlockSpec(shape, lambda i: (0, 0))

    kernel = functools.partial(encoder_kernel, ds=Ds, da=Da, fp=Fp)

    out = pl.pallas_call(
        kernel,
        out_shape=jax.ShapeDtypeStruct((B_pad, Fp2), jnp.bfloat16),
        grid=(B_pad // TB,),
        in_specs=[
            row_spec(Ds), row_spec(Da), row_spec(Ds),
            const_spec((K, H)), const_spec((1, H)),
            const_spec((H, H)), const_spec((1, H)),
            const_spec((H, Fp2)), const_spec((1, Fp2)),
        ],
        out_specs=pl.BlockSpec((TB, Fp2), lambda i: (i, 0)),
        scratch_shapes=[pltpu.VMEM((TB, K), jnp.bfloat16)],
        compiler_params=pltpu.CompilerParams(
            dimension_semantics=("parallel",),
            vmem_limit_bytes=vmem_bytes,
        ),
    )(state, action, next_state,
      eparams["w1"], eparams["b1"],
      eparams["w2"], eparams["b2"],
      eparams["w_head"], eparams["b_head"])

    # Slice + cast fuse into one small XLA op over the compact bf16 slab.
    mean = out[:B, :feature_dim].astype(jnp.float32)
    log_std = out[:B, Fp:Fp + feature_dim].astype(jnp.float32)
    return mean, log_std


# ---------------------------------------------------------------------------
# Parameter construction / preparation
# ---------------------------------------------------------------------------
def make_params(key, state_dim, action_dim, feature_dim, hidden_dim):
    """Deterministic synthetic f32 parameters (shapes match nn.Linear)."""
    input_dim = state_dim + action_dim + state_dim
    ks = jax.random.split(key, 8)

    def linear(kw, kb, fan_in, fan_out):
        bound = 1.0 / jnp.sqrt(jnp.float32(fan_in))
        w = jax.random.uniform(kw, (fan_in, fan_out), jnp.float32, -bound, bound)
        b = jax.random.uniform(kb, (1, fan_out), jnp.float32, -bound, bound)
        return w, b

    w1, b1 = linear(ks[0], ks[1], input_dim, hidden_dim)
    w2, b2 = linear(ks[2], ks[3], hidden_dim, hidden_dim)
    wm, bm = linear(ks[4], ks[5], hidden_dim, feature_dim)
    ws, bs = linear(ks[6], ks[7], hidden_dim, feature_dim)
    return dict(w1=w1, b1=b1, w2=w2, b2=b2, wm=wm, bm=bm, ws=ws, bs=bs)


def prepare_encoder_params(params):
    """Fuse + lane-pad the two heads (to 64 lanes each -> 128-lane slab),
    cast weights to bf16. Biases stay f32 (added to the f32 accumulator)."""
    w1, b1 = params["w1"], params["b1"]
    w2, b2 = params["w2"], params["b2"]
    wm, bm = params["wm"], params["bm"]
    ws, bs = params["ws"], params["bs"]
    H = w1.shape[1]
    Fdim = wm.shape[1]
    Fp = _round_up(Fdim, _HEAD_ALIGN)   # 2*Fp is a multiple of 128 (lane-dense)

    def pad_head(w, b):
        wp = jnp.zeros((H, Fp), jnp.float32).at[:, :Fdim].set(w)
        bp = jnp.zeros((1, Fp), jnp.float32).at[:, :Fdim].set(b)
        return wp, bp

    wm_p, bm_p = pad_head(wm, bm)
    ws_p, bs_p = pad_head(ws, bs)
    w_head = jnp.concatenate([wm_p, ws_p], axis=1)   # [H, 2*Fp]
    b_head = jnp.concatenate([bm_p, bs_p], axis=1)   # [1, 2*Fp]

    bf16 = jnp.bfloat16
    return dict(
        w1=w1.astype(bf16), b1=b1.astype(jnp.float32),
        w2=w2.astype(bf16), b2=b2.astype(jnp.float32),
        w_head=w_head.astype(bf16), b_head=b_head.astype(jnp.float32),
    )


# ---------------------------------------------------------------------------
# References
# ---------------------------------------------------------------------------
def reference_forward_f32(state, action, next_state, params):
    x = jnp.concatenate([state, action, next_state], axis=-1)
    z = jax.nn.relu(x @ params["w1"] + params["b1"])
    z = jax.nn.relu(z @ params["w2"] + params["b2"])
    mean = z @ params["wm"] + params["bm"]
    log_std = jnp.clip(z @ params["ws"] + params["bs"], LOG_SIG_MIN, LOG_SIG_MAX)
    return mean, log_std


def reference_forward_bf16(state, action, next_state, params):
    """Reference with the kernel's numerics (bf16 operands, f32 accumulation,
    bf16 output rounding)."""
    bf16, f32 = jnp.bfloat16, jnp.float32
    dot = lambda a, b: jnp.dot(a, b.astype(bf16), preferred_element_type=f32)
    x = jnp.concatenate([state, action, next_state], axis=-1).astype(bf16)
    z = jax.nn.relu(dot(x, params["w1"]) + params["b1"]).astype(bf16)
    z = jax.nn.relu(dot(z, params["w2"]) + params["b2"]).astype(bf16)
    mean = (dot(z, params["wm"]) + params["bm"]).astype(bf16).astype(f32)
    log_std = jnp.clip(dot(z, params["ws"]) + params["bs"],
                       LOG_SIG_MIN, LOG_SIG_MAX).astype(bf16).astype(f32)
    return mean, log_std


# TODO(synk): Encoder.sample (Normal.rsample) is not implemented; only forward().

if __name__ == "__main__":
    batch = 8
    state_dim = 8
    action_dim = 4
    hidden_dim = 32
    feature_dim = 32

    key = jax.random.PRNGKey(0)
    k_s, k_a, k_ns, k_p = jax.random.split(key, 4)

    state = jax.random.normal(k_s, (batch, state_dim), jnp.float32)
    action = jax.random.normal(k_a, (batch, action_dim), jnp.float32)
    next_state = jax.random.normal(k_ns, (batch, state_dim), jnp.float32)

    params = make_params(k_p, state_dim, action_dim, feature_dim, hidden_dim)
    eparams = prepare_encoder_params(params)

    fwd = jax.jit(encoder_forward, static_argnames=("feature_dim", "tb"))
    mean, log_std = fwd(state, action, next_state, eparams,
                        feature_dim=feature_dim)
    jax.block_until_ready((mean, log_std))

    assert mean.shape == (batch, feature_dim)
    assert log_std.shape == (batch, feature_dim)
    assert mean.dtype == jnp.float32 and log_std.dtype == jnp.float32

    # Tight check against a reference with matching bf16-in / f32-acc / bf16-out math.
    m_bf, ls_bf = reference_forward_bf16(state, action, next_state, params)
    assert jnp.allclose(mean, m_bf, atol=1e-2, rtol=1e-2), "mean mismatch (bf16 ref)"
    assert jnp.allclose(log_std, ls_bf, atol=1e-2, rtol=1e-2), "log_std mismatch (bf16 ref)"

    # Loose check against the full-f32 module semantics.
    m_f32, ls_f32 = reference_forward_f32(state, action, next_state, params)
    assert jnp.allclose(mean, m_f32, atol=6e-2, rtol=6e-2), "mean mismatch (f32 ref)"
    assert jnp.allclose(log_std, ls_f32, atol=6e-2, rtol=6e-2), "log_std mismatch (f32 ref)"

    assert jnp.all(log_std <= LOG_SIG_MAX) and jnp.all(log_std >= LOG_SIG_MIN)

    print("KERNEL_OK")
</pallas_src>

<mosaic_0001>
module attributes {stable_mosaic.version = 11 : i64} {
  func.func @encoder_kernel(%arg0: i32, %arg1: memref<8x8xf32, #tpu.memory_space<vmem>>, %arg2: memref<8x4xf32, #tpu.memory_space<vmem>>, %arg3: memref<8x8xf32, #tpu.memory_space<vmem>>, %arg4: memref<20x32xbf16, #tpu.memory_space<vmem>>, %arg5: memref<1x32xf32, #tpu.memory_space<vmem>>, %arg6: memref<32x32xbf16, #tpu.memory_space<vmem>>, %arg7: memref<1x32xf32, #tpu.memory_space<vmem>>, %arg8: memref<32x128xbf16, #tpu.memory_space<vmem>>, %arg9: memref<1x128xf32, #tpu.memory_space<vmem>>, %arg10: memref<8x128xbf16, #tpu.memory_space<vmem>>, %arg11: memref<8x20xbf16, #tpu.memory_space<vmem>>) attributes {dimension_semantics = [#tpu.dimension_semantics<parallel>], iteration_bounds = array<i64: 1>, scalar_prefetch = 0 : i64, scratch_operands = 1 : i64, tpu.core_type = #tpu.core_type<tc>, window_params = [{transform_indices = @transform_0, window_bounds = array<i64: 8, 8>}, {transform_indices = @transform_1, window_bounds = array<i64: 8, 4>}, {transform_indices = @transform_2, window_bounds = array<i64: 8, 8>}, {pipeline_mode = #tpu.pipeline_mode<synchronous>, transform_indices = @transform_3, window_bounds = array<i64: 20, 32>}, {pipeline_mode = #tpu.pipeline_mode<synchronous>, transform_indices = @transform_4, window_bounds = array<i64: 1, 32>}, {pipeline_mode = #tpu.pipeline_mode<synchronous>, transform_indices = @transform_5, window_bounds = array<i64: 32, 32>}, {pipeline_mode = #tpu.pipeline_mode<synchronous>, transform_indices = @transform_6, window_bounds = array<i64: 1, 32>}, {pipeline_mode = #tpu.pipeline_mode<synchronous>, transform_indices = @transform_7, window_bounds = array<i64: 32, 128>}, {pipeline_mode = #tpu.pipeline_mode<synchronous>, transform_indices = @transform_8, window_bounds = array<i64: 1, 128>}, {transform_indices = @transform_9, window_bounds = array<i64: 8, 128>}]} {
    %c0 = arith.constant 0 : index
    %c0_0 = arith.constant 0 : index
    %0 = vector.load %arg1[%c0, %c0_0] : memref<8x8xf32, #tpu.memory_space<vmem>>, vector<8x8xf32>
    %1 = arith.truncf %0 : vector<8x8xf32> to vector<8x8xbf16>
    %c0_1 = arith.constant 0 : index
    %c0_2 = arith.constant 0 : index
    %2 = vector.load %arg11[%c0_1, %c0_2] : memref<8x20xbf16, #tpu.memory_space<vmem>>, vector<8x8xbf16>
    tpu.vector_store %arg11[%c0_1, %c0_2], %1 {strides = array<i32>} : memref<8x20xbf16, #tpu.memory_space<vmem>>, vector<8x8xbf16>,
    %c0_3 = arith.constant 0 : index
    %c0_4 = arith.constant 0 : index
    %3 = vector.load %arg2[%c0_3, %c0_4] : memref<8x4xf32, #tpu.memory_space<vmem>>, vector<8x4xf32>
    %4 = arith.truncf %3 : vector<8x4xf32> to vector<8x4xbf16>
    %c0_5 = arith.constant 0 : index
    %c8 = arith.constant 8 : index
    %5 = vector.load %arg11[%c0_5, %c8] : memref<8x20xbf16, #tpu.memory_space<vmem>>, vector<8x4xbf16>
    tpu.vector_store %arg11[%c0_5, %c8], %4 {strides = array<i32>} : memref<8x20xbf16, #tpu.memory_space<vmem>>, vector<8x4xbf16>,
    %c0_6 = arith.constant 0 : index
    %c0_7 = arith.constant 0 : index
    %6 = vector.load %arg3[%c0_6, %c0_7] : memref<8x8xf32, #tpu.memory_space<vmem>>, vector<8x8xf32>
    %7 = arith.truncf %6 : vector<8x8xf32> to vector<8x8xbf16>
    %c0_8 = arith.constant 0 : index
    %c12 = arith.constant 12 : index
    %8 = vector.load %arg11[%c0_8, %c12] : memref<8x20xbf16, #tpu.memory_space<vmem>>, vector<8x8xbf16>
    tpu.vector_store %arg11[%c0_8, %c12], %7 {strides = array<i32>} : memref<8x20xbf16, #tpu.memory_space<vmem>>, vector<8x8xbf16>,
    %c0_9 = arith.constant 0 : index
    %c0_10 = arith.constant 0 : index
    %9 = vector.load %arg11[%c0_9, %c0_10] : memref<8x20xbf16, #tpu.memory_space<vmem>>, vector<8x20xbf16>
    %c0_11 = arith.constant 0 : index
    %c0_12 = arith.constant 0 : index
    %10 = vector.load %arg4[%c0_11, %c0_12] : memref<20x32xbf16, #tpu.memory_space<vmem>>, vector<20x32xbf16>
    %cst = arith.constant dense<0.000000e+00> : vector<8x32xf32>
    %11 = tpu.matmul %9, %10, %cst {dimension_numbers = #tpu.dot_dimension_numbers<[1], [0], [0], [1], [0, 0, 1, 1], [], []>} : vector<8x20xbf16>, vector<20x32xbf16>, vector<8x32xf32> -> vector<8x32xf32>
    %c0_13 = arith.constant 0 : index
    %c0_14 = arith.constant 0 : index
    %12 = vector.load %arg5[%c0_13, %c0_14] : memref<1x32xf32, #tpu.memory_space<vmem>>, vector<1x32xf32>
    %13 = vector.broadcast %12 : vector<1x32xf32> to vector<8x32xf32>
    %14 = arith.addf %11, %13 : vector<8x32xf32>
    %cst_15 = arith.constant 0.000000e+00 : f32
    %15 = vector.broadcast %cst_15 : f32 to vector<8x32xf32>
    %16 = arith.maximumf %14, %15 : vector<8x32xf32>
    %17 = arith.truncf %16 : vector<8x32xf32> to vector<8x32xbf16>
    %c0_16 = arith.constant 0 : index
    %c0_17 = arith.constant 0 : index
    %18 = vector.load %arg6[%c0_16, %c0_17] : memref<32x32xbf16, #tpu.memory_space<vmem>>, vector<32x32xbf16>
    %cst_18 = arith.constant dense<0.000000e+00> : vector<8x32xf32>
    %19 = tpu.matmul %17, %18, %cst_18 {dimension_numbers = #tpu.dot_dimension_numbers<[1], [0], [0], [1], [0, 0, 1, 1], [], []>} : vector<8x32xbf16>, vector<32x32xbf16>, vector<8x32xf32> -> vector<8x32xf32>
    %c0_19 = arith.constant 0 : index
    %c0_20 = arith.constant 0 : index
    %20 = vector.load %arg7[%c0_19, %c0_20] : memref<1x32xf32, #tpu.memory_space<vmem>>, vector<1x32xf32>
    %21 = vector.broadcast %20 : vector<1x32xf32> to vector<8x32xf32>
    %22 = arith.addf %19, %21 : vector<8x32xf32>
    %cst_21 = arith.constant 0.000000e+00 : f32
    %23 = vector.broadcast %cst_21 : f32 to vector<8x32xf32>
    %24 = arith.maximumf %22, %23 : vector<8x32xf32>
    %25 = arith.truncf %24 : vector<8x32xf32> to vector<8x32xbf16>
    %c0_22 = arith.constant 0 : index
    %c0_23 = arith.constant 0 : index
    %26 = vector.load %arg8[%c0_22, %c0_23] : memref<32x128xbf16, #tpu.memory_space<vmem>>, vector<32x128xbf16>
    %cst_24 = arith.constant dense<0.000000e+00> : vector<8x128xf32>
    %27 = tpu.matmul %25, %26, %cst_24 {dimension_numbers = #tpu.dot_dimension_numbers<[1], [0], [0], [1], [0, 0, 1, 1], [], []>} : vector<8x32xbf16>, vector<32x128xbf16>, vector<8x128xf32> -> vector<8x128xf32>
    %c0_25 = arith.constant 0 : index
    %c0_26 = arith.constant 0 : index
    %28 = vector.load %arg9[%c0_25, %c0_26] : memref<1x128xf32, #tpu.memory_space<vmem>>, vector<1x128xf32>
    %29 = vector.broadcast %28 : vector<1x128xf32> to vector<8x128xf32>
    %30 = arith.addf %27, %29 : vector<8x128xf32>
    %31 = tpu.iota {dimensions = array<i32: 1>} : vector<8x128xi32>
    %c64_i32 = arith.constant 64 : i32
    %32 = vector.broadcast %c64_i32 : i32 to vector<8x128xi32>
    %33 = arith.cmpi sge, %31, %32 : vector<8x128xi32>
    %cst_27 = arith.constant -2.000000e+01 : f32
    %cst_28 = arith.constant 2.000000e+00 : f32
    %34 = vector.broadcast %cst_27 : f32 to vector<8x128xf32>
    %35 = arith.maximumf %34, %30 : vector<8x128xf32>
    %36 = vector.broadcast %cst_28 : f32 to vector<8x128xf32>
    %37 = arith.minimumf %36, %35 : vector<8x128xf32>
    %38 = arith.select %33, %37, %30 : vector<8x128xi1>, vector<8x128xf32>
    %39 = arith.truncf %38 : vector<8x128xf32> to vector<8x128xbf16>
    %c0_29 = arith.constant 0 : index
    %c0_30 = arith.constant 0 : index
    %40 = vector.load %arg10[%c0_29, %c0_30] : memref<8x128xbf16, #tpu.memory_space<vmem>>, vector<8x128xbf16>
    tpu.vector_store %arg10[%c0_29, %c0_30], %39 {strides = array<i32>} : memref<8x128xbf16, #tpu.memory_space<vmem>>, vector<8x128xbf16>,
    return
  }
  func.func @transform_0(%arg0: i32) -> (i32, i32) {
    %c0_i32 = arith.constant 0 : i32
    %c0_i32_0 = arith.constant 0 : i32
    return %arg0, %c0_i32 : i32, i32
  }
  func.func @transform_1(%arg0: i32) -> (i32, i32) {
    %c0_i32 = arith.constant 0 : i32
    %c0_i32_0 = arith.constant 0 : i32
    return %arg0, %c0_i32 : i32, i32
  }
  func.func @transform_2(%arg0: i32) -> (i32, i32) {
    %c0_i32 = arith.constant 0 : i32
    %c0_i32_0 = arith.constant 0 : i32
    return %arg0, %c0_i32 : i32, i32
  }
  func.func @transform_3(%arg0: i32) -> (i32, i32) {
    %c0_i32 = arith.constant 0 : i32
    %c0_i32_0 = arith.constant 0 : i32
    %c0_i32_1 = arith.constant 0 : i32
    return %c0_i32, %c0_i32_0 : i32, i32
  }
  func.func @transform_4(%arg0: i32) -> (i32, i32) {
    %c0_i32 = arith.constant 0 : i32
    %c0_i32_0 = arith.constant 0 : i32
    %c0_i32_1 = arith.constant 0 : i32
    return %c0_i32, %c0_i32_0 : i32, i32
  }
  func.func @transform_5(%arg0: i32) -> (i32, i32) {
    %c0_i32 = arith.constant 0 : i32
    %c0_i32_0 = arith.constant 0 : i32
    %c0_i32_1 = arith.constant 0 : i32
    return %c0_i32, %c0_i32_0 : i32, i32
  }
  func.func @transform_6(%arg0: i32) -> (i32, i32) {
    %c0_i32 = arith.constant 0 : i32
    %c0_i32_0 = arith.constant 0 : i32
    %c0_i32_1 = arith.constant 0 : i32
    return %c0_i32, %c0_i32_0 : i32, i32
  }
  func.func @transform_7(%arg0: i32) -> (i32, i32) {
    %c0_i32 = arith.constant 0 : i32
    %c0_i32_0 = arith.constant 0 : i32
    %c0_i32_1 = arith.constant 0 : i32
    return %c0_i32, %c0_i32_0 : i32, i32
  }
  func.func @transform_8(%arg0: i32) -> (i32, i32) {
    %c0_i32 = arith.constant 0 : i32
    %c0_i32_0 = arith.constant 0 : i32
    %c0_i32_1 = arith.constant 0 : i32
    return %c0_i32, %c0_i32_0 : i32, i32
  }
  func.func @transform_9(%arg0: i32) -> (i32, i32) {
    %c0_i32 = arith.constant 0 : i32
    %c0_i32_0 = arith.constant 0 : i32
    return %arg0, %c0_i32 : i32, i32
  }
}

</mosaic_0001>

<llo_original>
// kernel: encoder_forward.1
$region0: #{encoder_forward.1}
  #allocation0 [shape = 'u32[]', space=smem, size = 0x4, offset = 0x4, fixed_abs, tag = 'smem constant byte address 0x4 - core index']
  #allocation1 [shape = 'u32[144,128]{1,0:T(1,128)}', space=vmem, size = 0x12000, scoped, tag = 'internal scratch']
  #allocation2 [shape = 'bf16[8,20]{1,0:T(8,128)(2,1)}', space=vmem, size = 0x800, scoped, tag = 'scratch operand']
  %s0 = inlined_call_operand.hbm [shape: f32[8,8], index: 0, kind: input, shape index: {}]
  %s1 = inlined_call_operand.vmem [shape: f32[8,4], index: 1, kind: input, shape index: {}]
  %s2 = inlined_call_operand.hbm [shape: f32[8,8], index: 2, kind: input, shape index: {}]
  %s3 = inlined_call_operand.hbm [shape: bf16[20,32], index: 3, kind: input, shape index: {}]
  %s4 = inlined_call_operand.vmem [shape: f32[1,32], index: 4, kind: input, shape index: {}]
  %s5 = inlined_call_operand.vmem [shape: bf16[32,32], index: 5, kind: input, shape index: {}]
  %s6 = inlined_call_operand.vmem [shape: f32[1,32], index: 6, kind: input, shape index: {}]
  %s7 = inlined_call_operand.vmem [shape: bf16[32,128], index: 7, kind: input, shape index: {}]
  %s8 = inlined_call_operand.hbm [shape: f32[1,128], index: 8, kind: input, shape index: {}]
  %s9 = inlined_call_operand.vmem [shape: bf16[8,128], index: 9, kind: output, shape index: {}]
  %s10 = sld [smem:[#allocation0]]
  $region62: #{encoder_forward.1} parent=0
    _
  %s12 = ssub.s32 1, %s10
  %s13 = scalar_select 0, %s12, %s10
  $region1: #{encoder_forward.1} parent=0
    #allocation3 [shape = 'u8[4096]{0}', space=vmem, size = 0x1000, scoped, tag = 'input window, operand 0, single buffered']
    #allocation4 [shape = 's32[1]{0}', space=sflag, size = 0x4, scoped, tag = 'scoped memory for encoder_forward.1']
    #allocation5 [shape = 'u8[4096]{0}', space=vmem, size = 0x1000, scoped, tag = 'input window, operand 2, single buffered']
    #allocation6 [shape = 's32[1]{0}', space=sflag, size = 0x4, scoped, tag = 'scoped memory for encoder_forward.1']
    #allocation7 [shape = 'u8[6144]{0}', space=vmem, size = 0x1800, scoped, tag = 'input window, operand 3, single buffered']
    #allocation8 [shape = 'u8[512]{0}', space=vmem, size = 0x400, scoped, tag = 'input window, operand 8, single buffered']
    #allocation9 [shape = 's32[1]{0}', space=sflag, size = 0x4, scoped, tag = 'scoped memory for encoder_forward.1']
    %14 = vsyncpa [#allocation4], 0
    %15 = vsyncpa [#allocation6], 0
    %16 = vsyncpa [#allocation9], 0
    // Predicated region
    $region2: #{encoder_forward.1} parent=1 // pred_check
      _
    $region3: #{encoder_forward.1} parent=1 // pred_check_branch
      %18 = sbr.rel (0) target = $region5
    $region4: #{encoder_forward.1} parent=1 // pred_region
      %s20 = ssub.s32 128, 128
      %21 = vsyncadd [#allocation4], %s20
      %s23 = sshll.u32 [#allocation3], 4
      %s24 = int_to_ptr.vmem [resolvable:$true] %s23
      %26 = dma.hbm_to_vmem [thread:$0]  %s0, 128, %s24, [#allocation4]
    $region5: #{encoder_forward.1} parent=1 // pred_fallthru
      _
    // Predicated region
    $region6: #{encoder_forward.1} parent=1 // pred_check
      _
    $region7: #{encoder_forward.1} parent=1 // pred_check_branch
      %28 = sbr.rel (0) target = $region9
    $region8: #{encoder_forward.1} parent=1 // pred_region
      _
    $region9: #{encoder_forward.1} parent=1 // pred_fallthru
      _
    // Predicated region
    $region10: #{encoder_forward.1} parent=1 // pred_check
      _
    $region11: #{encoder_forward.1} parent=1 // pred_check_branch
      %30 = sbr.rel (0) target = $region13
    $region12: #{encoder_forward.1} parent=1 // pred_region
      %s32 = ssub.s32 128, 128
      %33 = vsyncadd [#allocation6], %s32
      %s35 = sshll.u32 [#allocation5], 4
      %s36 = int_to_ptr.vmem [resolvable:$true] %s35
      %38 = dma.hbm_to_vmem [thread:$0]  %s2, 128, %s36, [#allocation6]
    $region13: #{encoder_forward.1} parent=1 // pred_fallthru
      _
    // Predicated region
    $region14: #{encoder_forward.1} parent=1 // pred_check
      _
    $region15: #{encoder_forward.1} parent=1 // pred_check_branch
      %40 = sbr.rel (0) target = $region17
    $region16: #{encoder_forward.1} parent=1 // pred_region
      %s42 = ssub.s32 192, 192
      %43 = vsyncadd [#allocation6], %s42
      %s44 = sshll.u32 [#allocation7], 4
      %s45 = int_to_ptr.vmem [resolvable:$true] %s44
      %50 = dma.hbm_to_vmem [thread:$0]  %s3, 192, %s45, [#allocation6], 64, 64, 4
    $region17: #{encoder_forward.1} parent=1 // pred_fallthru
      _
    // Predicated region
    $region18: #{encoder_forward.1} parent=1 // pred_check
      _
    $region19: #{encoder_forward.1} parent=1 // pred_check_branch
      %52 = sbr.rel (0) target = $region21
    $region20: #{encoder_forward.1} parent=1 // pred_region
      _
    $region21: #{encoder_forward.1} parent=1 // pred_fallthru
      _
    // Predicated region
    $region22: #{encoder_forward.1} parent=1 // pred_check
      _
    $region23: #{encoder_forward.1} parent=1 // pred_check_branch
      %54 = sbr.rel (0) target = $region25
    $region24: #{encoder_forward.1} parent=1 // pred_region
      _
    $region25: #{encoder_forward.1} parent=1 // pred_fallthru
      _
    // Predicated region
    $region26: #{encoder_forward.1} parent=1 // pred_check
      _
    $region27: #{encoder_forward.1} parent=1 // pred_check_branch
      %56 = sbr.rel (0) target = $region29
    $region28: #{encoder_forward.1} parent=1 // pred_region
      _
    $region29: #{encoder_forward.1} parent=1 // pred_fallthru
      _
    // Predicated region
    $region30: #{encoder_forward.1} parent=1 // pred_check
      _
    $region31: #{encoder_forward.1} parent=1 // pred_check_branch
      %58 = sbr.rel (0) target = $region33
    $region32: #{encoder_forward.1} parent=1 // pred_region
      _
    $region33: #{encoder_forward.1} parent=1 // pred_fallthru
      _
    // Predicated region
    $region34: #{encoder_forward.1} parent=1 // pred_check
      _
    $region35: #{encoder_forward.1} parent=1 // pred_check_branch
      %60 = sbr.rel (0) target = $region37
    $region36: #{encoder_forward.1} parent=1 // pred_region
      %s62 = ssub.s32 16, 16
      %63 = vsyncadd [#allocation9], %s62
      %s65 = sshll.u32 [#allocation8], 4
      %s66 = int_to_ptr.vmem [resolvable:$true] %s65
      %68 = dma.hbm_to_vmem [thread:$0]  %s8, 16, %s66, [#allocation9]
    $region37: #{encoder_forward.1} parent=1 // pred_fallthru
      _
    // Predicated region
    $region38: #{encoder_forward.1} parent=1 // pred_check
      _
    $region39: #{encoder_forward.1} parent=1 // pred_check_branch
      %70 = sbr.rel (0) target = $region41
    $region40: #{encoder_forward.1} parent=1 // pred_region
      %71 = dma.done [#allocation4], 128
    $region41: #{encoder_forward.1} parent=1 // pred_fallthru
      _
    // Predicated region
    $region42: #{encoder_forward.1} parent=1 // pred_check
      _
    $region43: #{encoder_forward.1} parent=1 // pred_check_branch
      %73 = sbr.rel (0) target = $region45
    $region44: #{encoder_forward.1} parent=1 // pred_region
      %74 = dma.done [#allocation6], 128
    $region45: #{encoder_forward.1} parent=1 // pred_fallthru
      _
    // Predicated region
    $region46: #{encoder_forward.1} parent=1 // pred_check
      _
    $region47: #{encoder_forward.1} parent=1 // pred_check_branch
      %76 = sbr.rel (0) target = $region49
    $region48: #{encoder_forward.1} parent=1 // pred_region
      %77 = dma.done [#allocation6], 192
    $region49: #{encoder_forward.1} parent=1 // pred_fallthru
      _
    // Predicated region
    $region50: #{encoder_forward.1} parent=1 // pred_check
      _
    $region51: #{encoder_forward.1} parent=1 // pred_check_branch
      %79 = sbr.rel (0) target = $region53
    $region52: #{encoder_forward.1} parent=1 // pred_region
      %80 = dma.done [#allocation9], 16
    $region53: #{encoder_forward.1} parent=1 // pred_fallthru
      _
    %v82 = vld [vmem:[#allocation3] sm:$0xff]
    %v83 = vpack.c.bf16 %v82, %v82
    %vm84 = vcmask 60416
    %85 = vst.msk [vmem:[#allocation2] sm:$0xf] %vm84, %v83
    %v86 = vld [vmem:[%s1] sm:$0xff]
    %v87 = vpack.c.bf16 %v86, %v86
    %v89 = vunpack.c.l.b16 %v87
    %v90 = vpack.c.b16 %v89, %v89
    %91 = vrot.lane.b32.xlu0 %v90, 8
    %v92 = vpop.permute.xlu0 %91
    %vm94 = vcmask 93248
    %95 = vst.msk [vmem:[#allocation2] sm:$0xf] %vm94, %v92
    %v96 = vld [vmem:[#allocation5] sm:$0xff]
    %v97 = vpack.c.bf16 %v96, %v96
    %v99 = vunpack.c.l.b16 %v97
    %v100 = vpack.c.b16 %v99, %v99
    %101 = vrot.lane.b32.xlu0 %v100, 12
    %v102 = vpop.permute.xlu0 %101
    %vm104 = vcmask 158816
    %105 = vst.msk [vmem:[#allocation2] sm:$0xf] %vm104, %v102
    %v106 = vld [vmem:[#allocation2] sm:$0xf]
    %v107 = vld [vmem:[#allocation7] sm:$0xf]
    %v108 = vld [vmem:[#allocation7 + $0x4] sm:$0xf]
    %v109 = vld [vmem:[#allocation7 + $0x8] sm:$0x3]
    %v110 = vld [vmem:[%s4] sm:$0x1]
    %v112 = vlaneseq
    %v113 = vshrl.u32 %v112, 7
    %v114 = vsub.s32 0, %v113
    %v115 = vrot.slane %v110, %v114
    %v120 = vunpack.c.l.b16 %v107
    %v121 = vunpack.c.l.b16 %v108
    %v122 = vunpack.c.l.b16 %v109
    %v123 = vpack.c.b16 %v121, %v120
    %v124 = vpack.c.b16 %v122, %v122
    %vm126 = vcmask 162816
    %v128 = vsel %vm126, %v106, 0
    %vm130 = vcmask 1041408
    %v132 = vsel %vm130, %v124, 0
    %134 = vmatprep.subr.bf16.mxu0 0
    %135 = vmatpush1.bf16.msra.mxu0 %v123
    %136 = vmatprep.subr.bf16.mxu0 0
    %137 = vmatpush1.bf16.msra.mxu0 %v132
    %138 = vmatprep.subr.bf16.mxu0 0
    %139 = vmatpush1.bf16.msra.mxu0 0
    %140 = vmatprep.subr.bf16.mxu0 0
    %141 = vmatpush1.bf16.msra.mxu0 0
    %142 = vmatprep.subr.bf16.mxu0 0
    %143 = vmatpush1.bf16.msra.mxu0 0
    %144 = vmatprep.subr.bf16.mxu0 0
    %145 = vmatpush1.bf16.msra.mxu0 0
    %146 = vmatprep.subr.bf16.mxu0 0
    %147 = vmatpush1.bf16.msra.mxu0 0
    %148 = vmatprep.subr.bf16.mxu0 0
    %149 = vmatpush1.bf16.msra.mxu0 0
    %150 = vmatprep.subr.bf16.mxu0 0
    %151 = vmatpush1.bf16.msra.mxu0 0
    %152 = vmatprep.subr.bf16.mxu0 0
    %153 = vmatpush1.bf16.msra.mxu0 0
    %154 = vmatprep.subr.bf16.mxu0 0
    %155 = vmatpush1.bf16.msra.mxu0 0
    %156 = vmatprep.subr.bf16.mxu0 0
    %157 = vmatpush1.bf16.msra.mxu0 0
    %158 = vmatprep.subr.bf16.mxu0 0
    %159 = vmatpush1.bf16.msra.mxu0 0
    %160 = vmatprep.subr.bf16.mxu0 0
    %161 = vmatpush1.bf16.msra.mxu0 0
    %162 = vmatprep.subr.bf16.mxu0 0
    %163 = vmatpush1.bf16.msra.mxu0 0
    %164 = vmatprep.subr.bf16.mxu0 0
    %165 = vmatpush1.bf16.msra.mxu0 0
    %166 = vmatprep.mubr.bf16.mxu0 0
    %167 = vmatmul.mubr.bf16.gmra.mrb[0].mxu0 %v128
    %v168 = vpop.f32.mrb[0].mxu0
    %v169 = vadd.f32 %v115, %v168
    %v170 = vpop.f32.mrb[0].mxu0
    %v171 = vpop.f32.mrb[0].mxu0
    %v172 = vpop.f32.mrb[0].mxu0
    %173 = vdwg.mxu0
    %v174 = vmax.f32 %v169, 0.0
    %v175 = vpack.c.bf16 %v174, %v174
    %v176 = vld [vmem:[%s5] sm:$0xf]
    %v177 = vld [vmem:[%s5 + $0x4] sm:$0xf]
    %v178 = vld [vmem:[%s5 + $0x8] sm:$0xf]
    %v179 = vld [vmem:[%s5 + $0xc] sm:$0xf]
    %v180 = vld [vmem:[%s6] sm:$0x1]
    %v182 = vlaneseq
    %v183 = vshrl.u32 %v182, 7
    %v184 = vsub.s32 0, %v183
    %v185 = vrot.slane %v180, %v184
    %v191 = vunpack.c.l.b16 %v176
    %v192 = vunpack.c.l.b16 %v177
    %v193 = vunpack.c.l.b16 %v178
    %v194 = vunpack.c.l.b16 %v179
    %v195 = vpack.c.b16 %v192, %v191
    %v196 = vpack.c.b16 %v194, %v193
    %vm199 = vcmask 261120
    %v201 = vsel %vm199, %v175, 0
    %203 = vmatprep.subr.bf16.mxu0 0
    %204 = vmatpush1.bf16.msra.mxu0 %v195
    %205 = vmatprep.subr.bf16.mxu0 0
    %206 = vmatpush1.bf16.msra.mxu0 %v196
    %207 = vmatprep.subr.bf16.mxu0 0
    %208 = vmatpush1.bf16.msra.mxu0 0
    %209 = vmatprep.subr.bf16.mxu0 0
    %210 = vmatpush1.bf16.msra.mxu0 0
    %211 = vmatprep.subr.bf16.mxu0 0
    %212 = vmatpush1.bf16.msra.mxu0 0
    %213 = vmatprep.subr.bf16.mxu0 0
    %214 = vmatpush1.bf16.msra.mxu0 0
    %215 = vmatprep.subr.bf16.mxu0 0
    %216 = vmatpush1.bf16.msra.mxu0 0
    %217 = vmatprep.subr.bf16.mxu0 0
    %218 = vmatpush1.bf16.msra.mxu0 0
    %219 = vmatprep.subr.bf16.mxu0 0
    %220 = vmatpush1.bf16.msra.mxu0 0
    %221 = vmatprep.subr.bf16.mxu0 0
    %222 = vmatpush1.bf16.msra.mxu0 0
    %223 = vmatprep.subr.bf16.mxu0 0
    %224 = vmatpush1.bf16.msra.mxu0 0
    %225 = vmatprep.subr.bf16.mxu0 0
    %226 = vmatpush1.bf16.msra.mxu0 0
    %227 = vmatprep.subr.bf16.mxu0 0
    %228 = vmatpush1.bf16.msra.mxu0 0
    %229 = vmatprep.subr.bf16.mxu0 0
    %230 = vmatpush1.bf16.msra.mxu0 0
    %231 = vmatprep.subr.bf16.mxu0 0
    %232 = vmatpush1.bf16.msra.mxu0 0
    %233 = vmatprep.subr.bf16.mxu0 0
    %234 = vmatpush1.bf16.msra.mxu0 0
    %235 = vmatprep.mubr.bf16.mxu0 0
    %236 = vmatmul.mubr.bf16.gmra.mrb[0].mxu0 %v201
    %v237 = vpop.f32.mrb[0].mxu0
    %v238 = vadd.f32 %v185, %v237
    %v239 = vpop.f32.mrb[0].mxu0
    %v240 = vpop.f32.mrb[0].mxu0
    %v241 = vpop.f32.mrb[0].mxu0
    %242 = vdwg.mxu0
    %v243 = vmax.f32 %v238, 0.0
    %v244 = vpack.c.bf16 %v243, %v243
    %v245 = vld [vmem:[%s7] sm:$0xf]
    %v246 = vld [vmem:[%s7 + $0x4] sm:$0xf]
    %v247 = vld [vmem:[%s7 + $0x8] sm:$0xf]
    %v248 = vld [vmem:[%s7 + $0xc] sm:$0xf]
    %v249 = vld [vmem:[#allocation8] sm:$0x1]
    %v251 = vlaneseq
    %v252 = vshrl.u32 %v251, 7
    %v253 = vsub.s32 0, %v252
    %v254 = vrot.slane %v249, %v253
    %v260 = vunpack.c.l.b16 %v245
    %v261 = vunpack.c.l.b16 %v246
    %v262 = vunpack.c.l.b16 %v247
    %v263 = vunpack.c.l.b16 %v248
    %v264 = vpack.c.b16 %v261, %v260
    %v265 = vpack.c.b16 %v263, %v262
    %v269 = vsel %vm199, %v244, 0
    %271 = vmatprep.subr.bf16.mxu0 0
    %272 = vmatpush1.bf16.msra.mxu0 %v264
    %273 = vmatprep.subr.bf16.mxu0 0
    %274 = vmatpush1.bf16.msra.mxu0 %v265
    %275 = vmatprep.subr.bf16.mxu0 0
    %276 = vmatpush1.bf16.msra.mxu0 0
    %277 = vmatprep.subr.bf16.mxu0 0
    %278 = vmatpush1.bf16.msra.mxu0 0
    %279 = vmatprep.subr.bf16.mxu0 0
    %280 = vmatpush1.bf16.msra.mxu0 0
    %281 = vmatprep.subr.bf16.mxu0 0
    %282 = vmatpush1.bf16.msra.mxu0 0
    %283 = vmatprep.subr.bf16.mxu0 0
    %284 = vmatpush1.bf16.msra.mxu0 0
    %285 = vmatprep.subr.bf16.mxu0 0
    %286 = vmatpush1.bf16.msra.mxu0 0
    %287 = vmatprep.subr.bf16.mxu0 0
    %288 = vmatpush1.bf16.msra.mxu0 0
    %289 = vmatprep.subr.bf16.mxu0 0
    %290 = vmatpush1.bf16.msra.mxu0 0
    %291 = vmatprep.subr.bf16.mxu0 0
    %292 = vmatpush1.bf16.msra.mxu0 0
    %293 = vmatprep.subr.bf16.mxu0 0
    %294 = vmatpush1.bf16.msra.mxu0 0
    %295 = vmatprep.subr.bf16.mxu0 0
    %296 = vmatpush1.bf16.msra.mxu0 0
    %297 = vmatprep.subr.bf16.mxu0 0
    %298 = vmatpush1.bf16.msra.mxu0 0
    %299 = vmatprep.subr.bf16.mxu0 0
    %300 = vmatpush1.bf16.msra.mxu0 0
    %301 = vmatprep.subr.bf16.mxu0 0
    %302 = vmatpush1.bf16.msra.mxu0 0
    %303 = vmatprep.mubr.bf16.mxu0 0
    %304 = vmatmul.mubr.bf16.gmra.mrb[0].mxu0 %v269
    %v305 = vpop.f32.mrb[0].mxu0
    %v306 = vadd.f32 %v254, %v305
    %v307 = vpop.f32.mrb[0].mxu0
    %v308 = vpop.f32.mrb[0].mxu0
    %v309 = vpop.f32.mrb[0].mxu0
    %310 = vdwg.mxu0
    %v311 = vlaneseq
    %v312 = vand.u32 %v311, 127
    %vm313 = vcmp.ge.s32.totalorder %v312, 64
    %v314 = vmax.f32 %v306, -20.0
    %v315 = vmin.f32 %v314, 2.0
    %v316 = vsel %vm313, %v315, %v306
    %v317 = vpack.c.bf16 %v316, %v316
    %318 = vst [vmem:[%s9] sm:$0xf] %v317
    // Predicated region
    $region54: #{encoder_forward.1} parent=1 // pred_check
      _
    $region55: #{encoder_forward.1} parent=1 // pred_check_branch
      %320 = sbr.rel (0) target = $region57
    $region56: #{encoder_forward.1} parent=1 // pred_region
      _
    $region57: #{encoder_forward.1} parent=1 // pred_fallthru
      _
    // Predicated region
    $region58: #{encoder_forward.1} parent=1 // pred_check
      _
    $region59: #{encoder_forward.1} parent=1 // pred_check_branch
      %322 = sbr.rel (0) target = $region61
    $region60: #{encoder_forward.1} parent=1 // pred_region
      _
    $region61: #{encoder_forward.1} parent=1 // pred_fallthru
      _
    %323 = vsyncpa [#allocation4], 1
    %324 = vsyncpa [#allocation6], 1
    %325 = vsyncpa [#allocation9], 1

</llo_original>
